<compile_context>
chip_gen: v5e
topology: v5e:2x2
jax: 0.10.0
libtpu: 0.0.40
codegen_flags: <defaults>
</compile_context>

<pallas_src>
import jax
import jax.numpy as jnp
from jax.experimental import pallas as pl
from jax.experimental.pallas import tpu as pltpu


def mlp_kernel(x_ref, w1_ref, b1_ref, w2_ref, b2_ref, o_ref):
    # All operands live in VMEM; matmuls run on the MXU with f32 accumulation.
    x = x_ref[...]
    h = jnp.dot(x, w1_ref[...], preferred_element_type=jnp.float32) + b1_ref[...]
    # LeakyReLU with PyTorch default negative_slope = 0.01.
    h = jnp.where(h >= 0, h, 0.01 * h)
    y = jnp.dot(h, w2_ref[...], preferred_element_type=jnp.float32) + b2_ref[...]
    o_ref[...] = y.astype(o_ref.dtype)


def _round_up(n, m):
    return ((n + m - 1) // m) * m


def neural_net_forward(x, w1, b1, w2, b2, *, block_b=256):
    """x: (B, D_in); w1: (D_in, H); b1: (1, H) or (H,);
    w2: (H, D_out); b2: (1, D_out) or (D_out,)."""
    B, D_in = x.shape
    H = w1.shape[1]
    D_out = w2.shape[1]

    LANE, SUB = 128, 8
    D_in_p = _round_up(D_in, LANE)
    H_p = _round_up(H, LANE)
    D_out_p = _round_up(D_out, LANE)

    # Batch padding / tiling: tile must be a multiple of the 8-sublane size.
    B_p = _round_up(B, SUB)
    block_b = min(block_b, B_p)
    B_p = _round_up(B_p, block_b)

    dt = x.dtype
    # Zero-pad once in the wrapper. Padded rows/cols contribute exactly zero
    # to the valid outputs (zero weight rows/cols, zero bias entries), and
    # LeakyReLU(0) == 0, so slicing at the end recovers the exact result.
    xp = jnp.zeros((B_p, D_in_p), dt).at[:B, :D_in].set(x)
    w1p = jnp.zeros((D_in_p, H_p), dt).at[:D_in, :H].set(w1)
    b1p = jnp.zeros((1, H_p), dt).at[:, :H].set(jnp.reshape(b1, (1, H)))
    w2p = jnp.zeros((H_p, D_out_p), dt).at[:H, :D_out].set(w2)
    b2p = jnp.zeros((1, D_out_p), dt).at[:, :D_out].set(jnp.reshape(b2, (1, D_out)))

    grid = (B_p // block_b,)

    flops = 2 * B_p * (D_in_p * H_p + H_p * D_out_p)
    bytes_accessed = 4 * (B_p * D_in_p + D_in_p * H_p + H_p
                          + H_p * D_out_p + D_out_p + B_p * D_out_p)

    out_p = pl.pallas_call(
        mlp_kernel,
        out_shape=jax.ShapeDtypeStruct((B_p, D_out_p), dt),
        grid=grid,
        in_specs=[
            # x: streamed one batch tile per grid step.
            pl.BlockSpec((block_b, D_in_p), lambda i: (i, 0)),
            # Weights/biases: constant index_map -> stay VMEM-resident.
            pl.BlockSpec((D_in_p, H_p), lambda i: (0, 0)),
            pl.BlockSpec((1, H_p), lambda i: (0, 0)),
            pl.BlockSpec((H_p, D_out_p), lambda i: (0, 0)),
            pl.BlockSpec((1, D_out_p), lambda i: (0, 0)),
        ],
        out_specs=pl.BlockSpec((block_b, D_out_p), lambda i: (i, 0)),
        compiler_params=pltpu.CompilerParams(
            dimension_semantics=("parallel",)),
        cost_estimate=pl.CostEstimate(
            flops=flops, transcendentals=0, bytes_accessed=bytes_accessed),
    )(xp, w1p, b1p, w2p, b2p)

    return out_p[:B, :D_out]


if __name__ == "__main__":
    # Small shapes consistent with the module: batch=8, input_dim=32,
    # hidden_dim=64, output_dim=16.
    B, D_in, H, D_out = 8, 32, 64, 16

    key = jax.random.PRNGKey(0)
    kx, k1, k2, k3, k4 = jax.random.split(key, 5)

    x = jax.random.normal(kx, (B, D_in), dtype=jnp.float32)

    # Deterministic parameter init (PyTorch-Linear-style uniform bounds).
    bound1 = 1.0 / (D_in ** 0.5)
    w1 = jax.random.uniform(k1, (D_in, H), minval=-bound1, maxval=bound1,
                            dtype=jnp.float32)
    b1 = jax.random.uniform(k2, (1, H), minval=-bound1, maxval=bound1,
                            dtype=jnp.float32)
    bound2 = 1.0 / (H ** 0.5)
    w2 = jax.random.uniform(k3, (H, D_out), minval=-bound2, maxval=bound2,
                            dtype=jnp.float32)
    b2 = jax.random.uniform(k4, (1, D_out), minval=-bound2, maxval=bound2,
                            dtype=jnp.float32)

    out = neural_net_forward(x, w1, b1, w2, b2)
    jax.block_until_ready(out)

    # Reference check in plain JAX.
    h_ref = x @ w1 + b1
    h_ref = jnp.where(h_ref >= 0, h_ref, 0.01 * h_ref)
    y_ref = h_ref @ w2 + b2
    assert out.shape == (B, D_out)
    assert jnp.allclose(out, y_ref, atol=1e-5, rtol=1e-5)

    print("KERNEL_OK")
</pallas_src>

<mosaic_0001>
module attributes {stable_mosaic.version = 11 : i64} {
  func.func @mlp_kernel(%arg0: i32, %arg1: memref<8x128xf32, #tpu.memory_space<vmem>>, %arg2: memref<128x128xf32, #tpu.memory_space<vmem>>, %arg3: memref<1x128xf32, #tpu.memory_space<vmem>>, %arg4: memref<128x128xf32, #tpu.memory_space<vmem>>, %arg5: memref<1x128xf32, #tpu.memory_space<vmem>>, %arg6: memref<8x128xf32, #tpu.memory_space<vmem>>) attributes {dimension_semantics = [#tpu.dimension_semantics<parallel>], iteration_bounds = array<i64: 1>, scalar_prefetch = 0 : i64, scratch_operands = 0 : i64, tpu.core_type = #tpu.core_type<tc>, window_params = [{transform_indices = @transform_0, window_bounds = array<i64: 8, 128>}, {pipeline_mode = #tpu.pipeline_mode<synchronous>, transform_indices = @transform_1, window_bounds = array<i64: 128, 128>}, {pipeline_mode = #tpu.pipeline_mode<synchronous>, transform_indices = @transform_2, window_bounds = array<i64: 1, 128>}, {pipeline_mode = #tpu.pipeline_mode<synchronous>, transform_indices = @transform_3, window_bounds = array<i64: 128, 128>}, {pipeline_mode = #tpu.pipeline_mode<synchronous>, transform_indices = @transform_4, window_bounds = array<i64: 1, 128>}, {transform_indices = @transform_5, window_bounds = array<i64: 8, 128>}]} {
    %c0 = arith.constant 0 : index
    %c0_0 = arith.constant 0 : index
    %0 = vector.load %arg1[%c0, %c0_0] : memref<8x128xf32, #tpu.memory_space<vmem>>, vector<8x128xf32>
    %c0_1 = arith.constant 0 : index
    %c0_2 = arith.constant 0 : index
    %1 = vector.load %arg2[%c0_1, %c0_2] : memref<128x128xf32, #tpu.memory_space<vmem>>, vector<128x128xf32>
    %cst = arith.constant dense<0.000000e+00> : vector<8x128xf32>
    %2 = tpu.matmul %0, %1, %cst {dimension_numbers = #tpu.dot_dimension_numbers<[1], [0], [0], [1], [0, 0, 1, 1], [], []>} : vector<8x128xf32>, vector<128x128xf32>, vector<8x128xf32> -> vector<8x128xf32>
    %c0_3 = arith.constant 0 : index
    %c0_4 = arith.constant 0 : index
    %3 = vector.load %arg3[%c0_3, %c0_4] : memref<1x128xf32, #tpu.memory_space<vmem>>, vector<1x128xf32>
    %4 = vector.broadcast %3 : vector<1x128xf32> to vector<8x128xf32>
    %5 = arith.addf %2, %4 : vector<8x128xf32>
    %cst_5 = arith.constant 0.000000e+00 : f32
    %6 = vector.broadcast %cst_5 : f32 to vector<8x128xf32>
    %7 = arith.cmpf oge, %5, %6 : vector<8x128xf32>
    %cst_6 = arith.constant 0.00999999977 : f32
    %8 = vector.broadcast %cst_6 : f32 to vector<8x128xf32>
    %9 = arith.mulf %8, %5 : vector<8x128xf32>
    %10 = arith.select %7, %5, %9 : vector<8x128xi1>, vector<8x128xf32>
    %c0_7 = arith.constant 0 : index
    %c0_8 = arith.constant 0 : index
    %11 = vector.load %arg4[%c0_7, %c0_8] : memref<128x128xf32, #tpu.memory_space<vmem>>, vector<128x128xf32>
    %cst_9 = arith.constant dense<0.000000e+00> : vector<8x128xf32>
    %12 = tpu.matmul %10, %11, %cst_9 {dimension_numbers = #tpu.dot_dimension_numbers<[1], [0], [0], [1], [0, 0, 1, 1], [], []>} : vector<8x128xf32>, vector<128x128xf32>, vector<8x128xf32> -> vector<8x128xf32>
    %c0_10 = arith.constant 0 : index
    %c0_11 = arith.constant 0 : index
    %13 = vector.load %arg5[%c0_10, %c0_11] : memref<1x128xf32, #tpu.memory_space<vmem>>, vector<1x128xf32>
    %14 = vector.broadcast %13 : vector<1x128xf32> to vector<8x128xf32>
    %15 = arith.addf %12, %14 : vector<8x128xf32>
    %c0_12 = arith.constant 0 : index
    %c0_13 = arith.constant 0 : index
    %16 = vector.load %arg6[%c0_12, %c0_13] : memref<8x128xf32, #tpu.memory_space<vmem>>, vector<8x128xf32>
    tpu.vector_store %arg6[%c0_12, %c0_13], %15 {strides = array<i32>} : memref<8x128xf32, #tpu.memory_space<vmem>>, vector<8x128xf32>,
    return
  }
  func.func @transform_0(%arg0: i32) -> (i32, i32) {
    %c0_i32 = arith.constant 0 : i32
    %c0_i32_0 = arith.constant 0 : i32
    return %arg0, %c0_i32 : i32, i32
  }
  func.func @transform_1(%arg0: i32) -> (i32, i32) {
    %c0_i32 = arith.constant 0 : i32
    %c0_i32_0 = arith.constant 0 : i32
    %c0_i32_1 = arith.constant 0 : i32
    return %c0_i32, %c0_i32_0 : i32, i32
  }
  func.func @transform_2(%arg0: i32) -> (i32, i32) {
    %c0_i32 = arith.constant 0 : i32
    %c0_i32_0 = arith.constant 0 : i32
    %c0_i32_1 = arith.constant 0 : i32
    return %c0_i32, %c0_i32_0 : i32, i32
  }
  func.func @transform_3(%arg0: i32) -> (i32, i32) {
    %c0_i32 = arith.constant 0 : i32
    %c0_i32_0 = arith.constant 0 : i32
    %c0_i32_1 = arith.constant 0 : i32
    return %c0_i32, %c0_i32_0 : i32, i32
  }
  func.func @transform_4(%arg0: i32) -> (i32, i32) {
    %c0_i32 = arith.constant 0 : i32
    %c0_i32_0 = arith.constant 0 : i32
    %c0_i32_1 = arith.constant 0 : i32
    return %c0_i32, %c0_i32_0 : i32, i32
  }
  func.func @transform_5(%arg0: i32) -> (i32, i32) {
    %c0_i32 = arith.constant 0 : i32
    %c0_i32_0 = arith.constant 0 : i32
    return %arg0, %c0_i32 : i32, i32
  }
}

</mosaic_0001>

<llo_original>
// kernel: tpu_custom_call.1
$region0: #{tpu_custom_call.1}
  #allocation0 [shape = 'u32[]', space=smem, size = 0x4, offset = 0x4, fixed_abs, tag = 'smem constant byte address 0x4 - core index']
  #allocation1 [shape = 'u32[72,128]{1,0:T(1,128)}', space=vmem, size = 0x9000, scoped, tag = 'internal scratch']
  %s0 = inlined_call_operand.hbm [shape: f32[8,128], index: 0, kind: input, shape index: {}]
  %s1 = inlined_call_operand.hbm [shape: f32[128,128], index: 1, kind: input, shape index: {}]
  %s2 = inlined_call_operand.vmem [shape: f32[1,128], index: 2, kind: input, shape index: {}]
  %s3 = inlined_call_operand.hbm [shape: f32[128,128], index: 3, kind: input, shape index: {}]
  %s4 = inlined_call_operand.vmem [shape: f32[1,128], index: 4, kind: input, shape index: {}]
  %s5 = inlined_call_operand.hbm [shape: f32[8,128], index: 5, kind: output, shape index: {}]
  %s6 = sld [smem:[#allocation0]]
  $region42: #{tpu_custom_call.1} parent=0
    _
  %s8 = ssub.s32 1, %s6
  %s9 = scalar_select 0, %s8, %s6
  $region1: #{tpu_custom_call.1} parent=0
    #allocation2 [shape = 'u8[4096]{0}', space=vmem, size = 0x1000, scoped, tag = 'input window, operand 0, single buffered']
    #allocation3 [shape = 's32[1]{0}', space=sflag, size = 0x4, scoped, tag = 'scoped memory for tpu_custom_call.1']
    #allocation4 [shape = 's32[1]{0}', space=sflag, size = 0x4, scoped, tag = 'scoped memory for tpu_custom_call.1']
    #allocation5 [shape = 'u8[65536]{0}', space=vmem, size = 0x10000, scoped, tag = 'input window, operand 1, single buffered']
    #allocation6 [shape = 's32[1]{0}', space=sflag, size = 0x4, scoped, tag = 'scoped memory for tpu_custom_call.1']
    #allocation7 [shape = 'u8[65536]{0}', space=vmem, size = 0x10000, scoped, tag = 'input window, operand 3, single buffered']
    #allocation8 [shape = 'u8[4096]{0}', space=vmem, size = 0x1000, scoped, tag = 'output window, operand 0, single buffered']
    %10 = vsyncpa [#allocation3], 0
    %11 = vsyncpa [#allocation6], 0
    %12 = vsyncpa [#allocation4], 0
    // Predicated region
    $region2: #{tpu_custom_call.1} parent=1 // pred_check
      _
    $region3: #{tpu_custom_call.1} parent=1 // pred_check_branch
      %14 = sbr.rel (0) target = $region5
    $region4: #{tpu_custom_call.1} parent=1 // pred_region
      %16 = vsyncadd [#allocation3], 0
      %s18 = sshll.u32 %s0, 4
      %s19 = int_to_ptr.hbm [resolvable:$true] %s18
      %s20 = sshll.u32 [#allocation2], 4
      %s21 = int_to_ptr.vmem [resolvable:$true] %s20
      %23 = dma.hbm_to_vmem [thread:$0]  %s19, 128, %s21, [#allocation3]
    $region5: #{tpu_custom_call.1} parent=1 // pred_fallthru
      _
    // Predicated region
    $region6: #{tpu_custom_call.1} parent=1 // pred_check
      _
    $region7: #{tpu_custom_call.1} parent=1 // pred_check_branch
      %25 = sbr.rel (0) target = $region9
    $region8: #{tpu_custom_call.1} parent=1 // pred_region
      %27 = vsyncadd [#allocation6], 0
      %s28 = sshll.u32 %s1, 4
      %s29 = int_to_ptr.hbm [resolvable:$true] %s28
      %s30 = sshll.u32 [#allocation5], 4
      %s31 = int_to_ptr.vmem [resolvable:$true] %s30
      %36 = dma.hbm_to_vmem [thread:$0]  %s29, 2048, %s31, [#allocation6], 128, 128, 8
    $region9: #{tpu_custom_call.1} parent=1 // pred_fallthru
      _
    // Predicated region
    $region10: #{tpu_custom_call.1} parent=1 // pred_check
      _
    $region11: #{tpu_custom_call.1} parent=1 // pred_check_branch
      %38 = sbr.rel (0) target = $region13
    $region12: #{tpu_custom_call.1} parent=1 // pred_region
      _
    $region13: #{tpu_custom_call.1} parent=1 // pred_fallthru
      _
    // Predicated region
    $region14: #{tpu_custom_call.1} parent=1 // pred_check
      _
    $region15: #{tpu_custom_call.1} parent=1 // pred_check_branch
      %40 = sbr.rel (0) target = $region17
    $region16: #{tpu_custom_call.1} parent=1 // pred_region
      %42 = vsyncadd [#allocation6], 0
      %s43 = sshll.u32 %s3, 4
      %s44 = int_to_ptr.hbm [resolvable:$true] %s43
      %s45 = sshll.u32 [#allocation7], 4
      %s46 = int_to_ptr.vmem [resolvable:$true] %s45
      %51 = dma.hbm_to_vmem [thread:$0]  %s44, 2048, %s46, [#allocation6], 128, 128, 8
    $region17: #{tpu_custom_call.1} parent=1 // pred_fallthru
      _
    // Predicated region
    $region18: #{tpu_custom_call.1} parent=1 // pred_check
      _
    $region19: #{tpu_custom_call.1} parent=1 // pred_check_branch
      %53 = sbr.rel (0) target = $region21
    $region20: #{tpu_custom_call.1} parent=1 // pred_region
      _
    $region21: #{tpu_custom_call.1} parent=1 // pred_fallthru
      _
    // Predicated region
    $region22: #{tpu_custom_call.1} parent=1 // pred_check
      _
    $region23: #{tpu_custom_call.1} parent=1 // pred_check_branch
      %55 = sbr.rel (0) target = $region25
    $region24: #{tpu_custom_call.1} parent=1 // pred_region
      %57 = dma.done [#allocation3], 128
    $region25: #{tpu_custom_call.1} parent=1 // pred_fallthru
      _
    // Predicated region
    $region26: #{tpu_custom_call.1} parent=1 // pred_check
      _
    $region27: #{tpu_custom_call.1} parent=1 // pred_check_branch
      %59 = sbr.rel (0) target = $region29
    $region28: #{tpu_custom_call.1} parent=1 // pred_region
      %61 = dma.done [#allocation6], 2048
    $region29: #{tpu_custom_call.1} parent=1 // pred_fallthru
      _
    // Predicated region
    $region30: #{tpu_custom_call.1} parent=1 // pred_check
      _
    $region31: #{tpu_custom_call.1} parent=1 // pred_check_branch
      %63 = sbr.rel (0) target = $region33
    $region32: #{tpu_custom_call.1} parent=1 // pred_region
      %65 = dma.done [#allocation6], 2048
    $region33: #{tpu_custom_call.1} parent=1 // pred_fallthru
      _
    %v66 = vld [vmem:[#allocation2] sm:$0xff]
    %v67 = vld [vmem:[#allocation5] sm:$0xff]
    %v68 = vld [vmem:[#allocation5 + $0x8] sm:$0xff]
    %v69 = vld [vmem:[#allocation5 + $0x10] sm:$0xff]
    %v70 = vld [vmem:[#allocation5 + $0x18] sm:$0xff]
    %v71 = vld [vmem:[#allocation5 + $0x20] sm:$0xff]
    %v72 = vld [vmem:[#allocation5 + $0x28] sm:$0xff]
    %v73 = vld [vmem:[#allocation5 + $0x30] sm:$0xff]
    %v74 = vld [vmem:[#allocation5 + $0x38] sm:$0xff]
    %v75 = vld [vmem:[#allocation5 + $0x40] sm:$0xff]
    %v76 = vld [vmem:[#allocation5 + $0x48] sm:$0xff]
    %v77 = vld [vmem:[#allocation5 + $0x50] sm:$0xff]
    %v78 = vld [vmem:[#allocation5 + $0x58] sm:$0xff]
    %v79 = vld [vmem:[#allocation5 + $0x60] sm:$0xff]
    %v80 = vld [vmem:[#allocation5 + $0x68] sm:$0xff]
    %v81 = vld [vmem:[#allocation5 + $0x70] sm:$0xff]
    %v82 = vld [vmem:[#allocation5 + $0x78] sm:$0xff]
    %v83 = vld [vmem:[%s2] sm:$0x1]
    %v85 = vperm.slane %v83, 0
    %87 = vmatpush.msra.mxu0 %v82
    %88 = vmatpush.msra.mxu0 %v81
    %89 = vmatpush.msra.mxu0 %v80
    %90 = vmatpush.msra.mxu0 %v79
    %91 = vmatpush.msra.mxu0 %v78
    %92 = vmatpush.msra.mxu0 %v77
    %93 = vmatpush.msra.mxu0 %v76
    %94 = vmatpush.msra.mxu0 %v75
    %95 = vmatpush.msra.mxu0 %v74
    %96 = vmatpush.msra.mxu0 %v73
    %97 = vmatpush.msra.mxu0 %v72
    %98 = vmatpush.msra.mxu0 %v71
    %99 = vmatpush.msra.mxu0 %v70
    %100 = vmatpush.msra.mxu0 %v69
    %101 = vmatpush.msra.mxu0 %v68
    %102 = vmatpush.msra.mxu0 %v67
    %103 = vmatmul.f32.gmra.mxu0 %v66
    %v104 = vpop.f32.mrf.mxu0
    %v105 = vadd.f32 %v85, %v104
    %106 = vdwg.mxu0
    %vm107 = vcmp.ge.f32.partialorder %v105, 0.0
    %v108 = vmul.f32 %v105, 0.01
    %v109 = vsel %vm107, %v105, %v108
    %v110 = vld [vmem:[#allocation7] sm:$0xff]
    %v111 = vld [vmem:[#allocation7 + $0x8] sm:$0xff]
    %v112 = vld [vmem:[#allocation7 + $0x10] sm:$0xff]
    %v113 = vld [vmem:[#allocation7 + $0x18] sm:$0xff]
    %v114 = vld [vmem:[#allocation7 + $0x20] sm:$0xff]
    %v115 = vld [vmem:[#allocation7 + $0x28] sm:$0xff]
    %v116 = vld [vmem:[#allocation7 + $0x30] sm:$0xff]
    %v117 = vld [vmem:[#allocation7 + $0x38] sm:$0xff]
    %v118 = vld [vmem:[#allocation7 + $0x40] sm:$0xff]
    %v119 = vld [vmem:[#allocation7 + $0x48] sm:$0xff]
    %v120 = vld [vmem:[#allocation7 + $0x50] sm:$0xff]
    %v121 = vld [vmem:[#allocation7 + $0x58] sm:$0xff]
    %v122 = vld [vmem:[#allocation7 + $0x60] sm:$0xff]
    %v123 = vld [vmem:[#allocation7 + $0x68] sm:$0xff]
    %v124 = vld [vmem:[#allocation7 + $0x70] sm:$0xff]
    %v125 = vld [vmem:[#allocation7 + $0x78] sm:$0xff]
    %v126 = vld [vmem:[%s4] sm:$0x1]
    %v128 = vperm.slane %v126, 0
    %130 = vmatpush.msra.mxu0 %v125
    %131 = vmatpush.msra.mxu0 %v124
    %132 = vmatpush.msra.mxu0 %v123
    %133 = vmatpush.msra.mxu0 %v122
    %134 = vmatpush.msra.mxu0 %v121
    %135 = vmatpush.msra.mxu0 %v120
    %136 = vmatpush.msra.mxu0 %v119
    %137 = vmatpush.msra.mxu0 %v118
    %138 = vmatpush.msra.mxu0 %v117
    %139 = vmatpush.msra.mxu0 %v116
    %140 = vmatpush.msra.mxu0 %v115
    %141 = vmatpush.msra.mxu0 %v114
    %142 = vmatpush.msra.mxu0 %v113
    %143 = vmatpush.msra.mxu0 %v112
    %144 = vmatpush.msra.mxu0 %v111
    %145 = vmatpush.msra.mxu0 %v110
    %146 = vmatmul.f32.gmra.mxu0 %v109
    %v147 = vpop.f32.mrf.mxu0
    %v148 = vadd.f32 %v128, %v147
    %149 = vdwg.mxu0
    %150 = vst [vmem:[#allocation8] sm:$0xff] %v148
    // Predicated region
    $region34: #{tpu_custom_call.1} parent=1 // pred_check
      _
    $region35: #{tpu_custom_call.1} parent=1 // pred_check_branch
      %152 = sbr.rel (0) target = $region37
    $region36: #{tpu_custom_call.1} parent=1 // pred_region
      %154 = vsyncadd [#allocation4], 0
      %s156 = sshll.u32 [#allocation8], 4
      %s157 = int_to_ptr.vmem [resolvable:$true] %s156
      %s158 = sshll.u32 %s5, 4
      %s159 = int_to_ptr.hbm [resolvable:$true] %s158
      %161 = dma.vmem_to_hbm [thread:$0]  %s157, 128, %s159, [#allocation4]
    $region37: #{tpu_custom_call.1} parent=1 // pred_fallthru
      _
    // Predicated region
    $region38: #{tpu_custom_call.1} parent=1 // pred_check
      _
    $region39: #{tpu_custom_call.1} parent=1 // pred_check_branch
      %163 = sbr.rel (0) target = $region41
    $region40: #{tpu_custom_call.1} parent=1 // pred_region
      %165 = dma.done [#allocation4], 128
    $region41: #{tpu_custom_call.1} parent=1 // pred_fallthru
      _
    %166 = vsyncpa [#allocation3], 1
    %167 = vsyncpa [#allocation6], 1
    %168 = vsyncpa [#allocation4], 1

</llo_original>
